<compile_context>
chip_gen: v7x
topology: tpu7x:2x2x1
jax: 0.10.0
libtpu: 0.0.40
codegen_flags: <defaults>
</compile_context>

<pallas_src>
import jax
import jax.numpy as jnp
from jax.experimental import pallas as pl
from jax.experimental.pallas import tpu as pltpu

_EPS = 1e-12  # matches torch.nn.functional.normalize default


def _rmsnorm_kernel(x_ref, g_ref, o_ref):
    # x_ref: (bn, C, T)   g_ref: (1, C, 1)   o_ref: (bn, C, T)
    x = x_ref[...].astype(jnp.float32)
    ss = jnp.sum(x * x, axis=1, keepdims=True)                  # (bn, 1, T)
    # 1 / max(||x||, eps)  ==  rsqrt(max(ss, eps^2))   (sqrt is monotone)
    inv = jax.lax.rsqrt(jnp.maximum(ss, _EPS * _EPS))
    c = x_ref.shape[1]
    scale = g_ref[...].astype(jnp.float32) * (float(c) ** 0.5)  # (1, C, 1)
    # NOTE: on v7x with bf16 inputs the two scaling multiplies could run in
    # bf16 if VALU slot_util ever saturates; f32 keeps full accuracy and has
    # ample compute slack on v5e/v6e.
    o_ref[...] = (x * inv * scale).astype(o_ref.dtype)


def _vmem_params():
    """(block-VMEM budget, compiler vmem_limit_bytes) per chip generation."""
    kind = ""
    try:
        kind = jax.devices()[0].device_kind.lower()
    except Exception:
        pass
    if "v5" in kind or "v6" in kind:
        # 128 MiB physical VMEM: roomy budget keeps per-step DMAs large.
        return 48 << 20, 64 << 20
    # v7x (64 MiB / TC) and unknown chips: stay conservative.
    return 28 << 20, 48 << 20


def _choose_tiling(n, c, hw, itemsize, vmem_budget):
    """Pick (bn, tile_hw) for blocks of shape (bn, c, tile_hw)."""
    c_pad = -(-c // 8) * 8
    # VMEM bytes per lane-column per image:
    #   4 double-buffered block buffers (in + out) in the input dtype
    # + ~3 full-size f32 temporaries inside the kernel (upcast, square, prod).
    vmem_per_col = c_pad * (4 * itemsize + 3 * 4)
    # HBM bytes moved (in + out) per lane-column per image.
    hbm_per_col = 2 * c * itemsize

    max_cols = max(1, vmem_budget // vmem_per_col)

    # Lane tile over H*W: full hw if it fits, else a large multiple of 128
    # (the (8,128) BlockSpec constraint requires multiple-of-128 or full dim).
    if hw <= max_cols or hw <= 128:
        tile_hw = hw
    else:
        tile_hw = max(128, (min(max_cols, hw) // 128) * 128)

    # Batch images per step so each grid step moves >= ~8 MiB (in + out).
    target_step = 8 << 20
    bn_vmem = max(1, max_cols // tile_hw)
    bn_target = max(1, -(-target_step // (hbm_per_col * tile_hw)))
    bn = max(1, min(n, bn_vmem, bn_target))

    # Keep enough blocks to feed both v7x TensorCores, without shrinking the
    # per-step transfer below ~2 MiB (step overhead would dominate again).
    min_blocks, step_floor = 4, 2 << 20
    n_blocks = lambda b, t: (-(-n // b)) * (-(-hw // t))
    step_bytes = lambda b, t: hbm_per_col * b * t
    while n_blocks(bn, tile_hw) < min_blocks:
        bn_c = (bn + 1) // 2
        if bn > 1 and step_bytes(bn_c, tile_hw) >= step_floor:
            bn = bn_c
            continue
        if tile_hw > 128 and tile_hw % 128 == 0:
            thw_c = max(128, (tile_hw // 2) // 128 * 128)
            if thw_c < tile_hw and step_bytes(bn, thw_c) >= step_floor:
                tile_hw = thw_c
                continue
        break

    return bn, tile_hw


def rms_norm(x, g):
    """x: (N, C, H, W), g: (1, C, 1, 1)  ->  (N, C, H, W)"""
    n, c, h, w = x.shape
    hw = h * w

    # Contiguous trailing-dim reshapes: free (no data movement).
    x3 = x.reshape(n, c, hw)
    g3 = g.reshape(1, c, 1)

    vmem_budget, vmem_limit = _vmem_params()
    bn, tile_hw = _choose_tiling(n, c, hw, jnp.dtype(x.dtype).itemsize,
                                 vmem_budget)
    grid = (pl.cdiv(n, bn), pl.cdiv(hw, tile_hw))

    out3 = pl.pallas_call(
        _rmsnorm_kernel,
        out_shape=jax.ShapeDtypeStruct((n, c, hw), x.dtype),
        grid_spec=pltpu.PrefetchScalarGridSpec(
            num_scalar_prefetch=0,
            grid=grid,
            in_specs=[
                # If xprof ever shows exposed DMA, try pipeline_mode=
                # pl.Buffered(3) here (costs one more VMEM buffer).
                pl.BlockSpec((bn, c, tile_hw), lambda i, t: (i, 0, t)),
                pl.BlockSpec((1, c, 1), lambda i, t: (0, 0, 0)),
            ],
            out_specs=pl.BlockSpec((bn, c, tile_hw), lambda i, t: (i, 0, t)),
        ),
        compiler_params=pltpu.CompilerParams(
            dimension_semantics=("parallel", "parallel"),
            vmem_limit_bytes=vmem_limit,
        ),
    )(x3, g3)

    return out3.reshape(n, c, h, w)


def _reference(x, g):
    xf = x.astype(jnp.float32)
    norm = jnp.sqrt(jnp.sum(xf * xf, axis=1, keepdims=True))
    normalized = xf / jnp.maximum(norm, _EPS)
    return (normalized * g * (x.shape[1] ** 0.5)).astype(x.dtype)


if __name__ == "__main__":
    key = jax.random.PRNGKey(0)
    kx, kg = jax.random.split(key)

    n, c, h, w = 2, 4, 16, 16
    x = jax.random.normal(kx, (n, c, h, w), dtype=jnp.float32)
    # Parameter g is ones-initialized in the module; use non-trivial values
    # here to exercise the broadcast.
    g = 1.0 + 0.1 * jax.random.normal(kg, (1, c, 1, 1), dtype=jnp.float32)

    out = jax.block_until_ready(rms_norm(x, g))

    ref = _reference(x, g)
    assert out.shape == (n, c, h, w)
    assert jnp.allclose(out, ref, atol=1e-5, rtol=1e-5)
    print("KERNEL_OK")
</pallas_src>

<mosaic_0001>
module attributes {stable_mosaic.version = 11 : i64} {
  func.func @_rmsnorm_kernel(%arg0: i32, %arg1: i32, %arg2: memref<2x4x256xf32, #tpu.memory_space<vmem>>, %arg3: memref<1x4x1xf32, #tpu.memory_space<vmem>>, %arg4: memref<2x4x256xf32, #tpu.memory_space<vmem>>) attributes {dimension_semantics = [#tpu.dimension_semantics<parallel>, #tpu.dimension_semantics<parallel>], iteration_bounds = array<i64: 1, 1>, scalar_prefetch = 0 : i64, scratch_operands = 0 : i64, tpu.core_type = #tpu.core_type<tc>, window_params = [{transform_indices = @transform_0, window_bounds = array<i64: 2, 4, 256>}, {pipeline_mode = #tpu.pipeline_mode<synchronous>, transform_indices = @transform_1, window_bounds = array<i64: 1, 4, 1>}, {transform_indices = @transform_2, window_bounds = array<i64: 2, 4, 256>}]} {
    %c0 = arith.constant 0 : index
    %c0_0 = arith.constant 0 : index
    %c0_1 = arith.constant 0 : index
    %0 = vector.load %arg2[%c0, %c0_0, %c0_1] : memref<2x4x256xf32, #tpu.memory_space<vmem>>, vector<2x4x256xf32>
    %1 = arith.mulf %0, %0 : vector<2x4x256xf32>
    %cst = arith.constant dense<0.000000e+00> : vector<2x256xf32>
    %2 = vector.multi_reduction <add>, %1, %cst [1] : vector<2x4x256xf32> to vector<2x256xf32>
    %3 = vector.shape_cast %2 : vector<2x256xf32> to vector<2x1x256xf32>
    %cst_2 = arith.constant 1.000000e-24 : f32
    %4 = vector.broadcast %cst_2 : f32 to vector<2x1x256xf32>
    %5 = arith.maximumf %3, %4 : vector<2x1x256xf32>
    %6 = math.rsqrt %5 : vector<2x1x256xf32>
    %c0_3 = arith.constant 0 : index
    %c0_4 = arith.constant 0 : index
    %c0_5 = arith.constant 0 : index
    %7 = vector.load %arg3[%c0_3, %c0_4, %c0_5] : memref<1x4x1xf32, #tpu.memory_space<vmem>>, vector<1x4x1xf32>
    %cst_6 = arith.constant 2.000000e+00 : f32
    %8 = vector.broadcast %cst_6 : f32 to vector<1x4x1xf32>
    %9 = arith.mulf %7, %8 : vector<1x4x1xf32>
    %10 = vector.broadcast %6 : vector<2x1x256xf32> to vector<2x4x256xf32>
    %11 = arith.mulf %0, %10 : vector<2x4x256xf32>
    %12 = vector.broadcast %9 : vector<1x4x1xf32> to vector<2x4x256xf32>
    %13 = arith.mulf %11, %12 : vector<2x4x256xf32>
    %c0_7 = arith.constant 0 : index
    %c0_8 = arith.constant 0 : index
    %c0_9 = arith.constant 0 : index
    %14 = vector.load %arg4[%c0_7, %c0_8, %c0_9] : memref<2x4x256xf32, #tpu.memory_space<vmem>>, vector<2x4x256xf32>
    tpu.vector_store %arg4[%c0_7, %c0_8, %c0_9], %13 {strides = array<i32>} : memref<2x4x256xf32, #tpu.memory_space<vmem>>, vector<2x4x256xf32>,
    return
  }
  func.func @transform_0(%arg0: i32, %arg1: i32) -> (i32, i32, i32) {
    %c0_i32 = arith.constant 0 : i32
    %c0_i32_0 = arith.constant 0 : i32
    return %arg0, %c0_i32, %arg1 : i32, i32, i32
  }
  func.func @transform_1(%arg0: i32, %arg1: i32) -> (i32, i32, i32) {
    %c0_i32 = arith.constant 0 : i32
    %c0_i32_0 = arith.constant 0 : i32
    %c0_i32_1 = arith.constant 0 : i32
    %c0_i32_2 = arith.constant 0 : i32
    return %c0_i32, %c0_i32_0, %c0_i32_1 : i32, i32, i32
  }
  func.func @transform_2(%arg0: i32, %arg1: i32) -> (i32, i32, i32) {
    %c0_i32 = arith.constant 0 : i32
    %c0_i32_0 = arith.constant 0 : i32
    return %arg0, %c0_i32, %arg1 : i32, i32, i32
  }
}

</mosaic_0001>

<llo_original>
// kernel: tpu_custom_call.1
$region0: #{tpu_custom_call.1}
  #allocation0 [shape = 'u32[]', space=smem, size = 0x4, offset = 0x4, fixed_abs, tag = 'smem constant byte address 0x4 - core index']
  #allocation1 [shape = 'u32[144,128]{1,0:T(1,128)}', space=vmem, size = 0x12000, scoped, tag = 'internal scratch']
  %s0 = inlined_call_operand.hbm [shape: f32[2,4,256], index: 0, kind: input, shape index: {}]
  %s1 = inlined_call_operand.vmem [shape: f32[1,4,1], index: 1, kind: input, shape index: {}]
  %s2 = inlined_call_operand.hbm [shape: f32[2,4,256], index: 2, kind: output, shape index: {}]
  %s3 = sld [smem:[#allocation0]]
  $region22: #{tpu_custom_call.1} parent=0
    _
  %s5 = ssub.s32 1, %s3
  %s6 = scalar_select 0, %s5, %s3
  $region1: #{tpu_custom_call.1} parent=0
    #allocation2 [shape = 'u8[8192]{0}', space=vmem, size = 0x2000, scoped, tag = 'input window, operand 0, single buffered']
    #allocation3 [shape = 's32[1]{0}', space=sflag, size = 0x4, scoped, tag = 'scoped memory for tpu_custom_call.1']
    #allocation4 [shape = 's32[1]{0}', space=sflag, size = 0x4, scoped, tag = 'scoped memory for tpu_custom_call.1']
    #allocation5 [shape = 'u8[8192]{0}', space=vmem, size = 0x2000, scoped, tag = 'output window, operand 0, single buffered']
    %7 = vsyncpa [#allocation3], 0
    %8 = vsyncpa [#allocation4], 0
    // Predicated region
    $region2: #{tpu_custom_call.1} parent=1 // pred_check
      _
    $region3: #{tpu_custom_call.1} parent=1 // pred_check_branch
      %10 = sbr.rel (0) target = $region5
    $region4: #{tpu_custom_call.1} parent=1 // pred_region
      %s12 = ssub.s32 256, 256
      %13 = vsyncadd [#allocation3], %s12
      %s14 = sshll.u32 [#allocation2], 4
      %s15 = int_to_ptr.vmem [resolvable:$true] %s14
      %20 = dma.hbm_to_vmem [thread:$0]  %s0, 256, %s15, [#allocation3], 128, 128, 8
    $region5: #{tpu_custom_call.1} parent=1 // pred_fallthru
      _
    // Predicated region
    $region6: #{tpu_custom_call.1} parent=1 // pred_check
      _
    $region7: #{tpu_custom_call.1} parent=1 // pred_check_branch
      %22 = sbr.rel (0) target = $region9
    $region8: #{tpu_custom_call.1} parent=1 // pred_region
      _
    $region9: #{tpu_custom_call.1} parent=1 // pred_fallthru
      _
    // Predicated region
    $region10: #{tpu_custom_call.1} parent=1 // pred_check
      _
    $region11: #{tpu_custom_call.1} parent=1 // pred_check_branch
      %24 = sbr.rel (0) target = $region13
    $region12: #{tpu_custom_call.1} parent=1 // pred_region
      %25 = dma.done [#allocation3], 256
    $region13: #{tpu_custom_call.1} parent=1 // pred_fallthru
      _
    %v26 = vld [vmem:[#allocation2] sm:$0xff]
    %v27 = vld [vmem:[#allocation2 + $0x8] sm:$0xff]
    %v28 = vmul.f32 %v26, %v26
    %v29 = vmul.f32 %v27, %v27
    %v32 = vcombine.high %v28, %v28
    %v33 = vcombine.high %v29, %v29
    %vm36 = vcmask 1043456
    %v37 = vsel %vm36, %v28, 0.0
    %v38 = vrot.slane %v37, 4
    %v39 = vadd.f32 %v37, %v38
    %v40 = vrot.slane %v39, 2
    %v41 = vadd.f32 %v39, %v40
    %v42 = vrot.slane %v41, 1
    %v43 = vadd.f32 %v41, %v42
    %v44 = vsel %vm36, %v32, 0.0
    %v45 = vrot.slane %v44, 4
    %v46 = vadd.f32 %v44, %v45
    %v47 = vrot.slane %v46, 2
    %v48 = vadd.f32 %v46, %v47
    %v49 = vrot.slane %v48, 1
    %v50 = vadd.f32 %v48, %v49
    %v51 = vsel %vm36, %v29, 0.0
    %v52 = vrot.slane %v51, 4
    %v53 = vadd.f32 %v51, %v52
    %v54 = vrot.slane %v53, 2
    %v55 = vadd.f32 %v53, %v54
    %v56 = vrot.slane %v55, 1
    %v57 = vadd.f32 %v55, %v56
    %v58 = vsel %vm36, %v33, 0.0
    %v59 = vrot.slane %v58, 4
    %v60 = vadd.f32 %v58, %v59
    %v61 = vrot.slane %v60, 2
    %v62 = vadd.f32 %v60, %v61
    %v63 = vrot.slane %v62, 1
    %v64 = vadd.f32 %v62, %v63
    %v65 = vmax.f32 %v43, 1e-24
    %v66 = vmax.f32 %v50, 1e-24
    %v67 = vmax.f32 %v57, 1e-24
    %v68 = vmax.f32 %v64, 1e-24
    %v69 = vrsqrt.pop %v65
    %v70 = vrsqrt.pop %v66
    %v71 = vrsqrt.pop %v67
    %v72 = vrsqrt.pop %v68
    %v73 = vld [vmem:[%s1] sm:$0xf]
    %v74 = vmul.f32 %v73, 2.0
    %v79 = vcombine.low %v69, %v70
    %v80 = vcombine.low %v71, %v72
    %v83 = vmul.f32 %v26, %v79
    %v84 = vmul.f32 %v27, %v80
    %86 = vset.pattern.permute.xlu0 0
    %87 = vperm.xlu0 %86, %v74
    %v88 = vpop.permute.xlu0 %87
    %v90 = vunpack.c.l.s4 839922192
    %v91 = vunpack.c.0.s8 %v90
    %v92 = vlaneseq
    %v93 = vshrl.u32 %v92, 7
    %v94 = vsub.s32 %v91, %v93
    %v95 = vrot.slane %v88, %v94
    %v97 = vmul.f32 %v83, %v95
    %v98 = vmul.f32 %v84, %v95
    %99 = vst [vmem:[#allocation5] sm:$0xff] %v97
    %100 = vst [vmem:[#allocation5 + $0x8] sm:$0xff] %v98
    // Predicated region
    $region14: #{tpu_custom_call.1} parent=1 // pred_check
      _
    $region15: #{tpu_custom_call.1} parent=1 // pred_check_branch
      %102 = sbr.rel (0) target = $region17
    $region16: #{tpu_custom_call.1} parent=1 // pred_region
      %s104 = ssub.s32 256, 256
      %105 = vsyncadd [#allocation4], %s104
      %s106 = sshll.u32 [#allocation5], 4
      %s107 = int_to_ptr.vmem [resolvable:$true] %s106
      %112 = dma.vmem_to_hbm [thread:$0]  %s107, 256, %s2, [#allocation4], 128, 128, 8
    $region17: #{tpu_custom_call.1} parent=1 // pred_fallthru
      _
    // Predicated region
    $region18: #{tpu_custom_call.1} parent=1 // pred_check
      _
    $region19: #{tpu_custom_call.1} parent=1 // pred_check_branch
      %114 = sbr.rel (0) target = $region21
    $region20: #{tpu_custom_call.1} parent=1 // pred_region
      %115 = dma.done [#allocation4], 256
    $region21: #{tpu_custom_call.1} parent=1 // pred_fallthru
      _
    %116 = vsyncpa [#allocation3], 1
    %117 = vsyncpa [#allocation4], 1

</llo_original>
